<compile_context>
chip_gen: v7x
topology: tpu7x:2x2x1
jax: 0.10.0
libtpu: 0.0.40
codegen_flags: <defaults>
</compile_context>

<pallas_src>
import functools

import jax
import jax.numpy as jnp
from jax.experimental import pallas as pl
from jax.experimental.pallas import tpu as pltpu


def _round_up(x: int, m: int) -> int:
    return (x + m - 1) // m * m


def stl_kernel(x_ref, p_ref, o_ref, *,
               num_heads: int, tokens: int, dq: int, dq_pad: int):
    """Whole STL forward in one invocation (everything fits in a few vregs).

    x_ref: [N, dq]              query features (inputs)
    p_ref: [dq_pad + H*T, Wmax] packed params:
             rows [0:dq],        cols [0:H*T] -> W_score (K folded, pre-scaled)
             rows [dq_pad:+H*T], cols [0:E]   -> block-diagonal V
    o_ref: [N, E]               output style embedding (heads concatenated)
    """
    N = x_ref.shape[0]
    E = o_ref.shape[1]
    HT = num_heads * tokens

    w_score = p_ref[0:dq, 0:HT]                      # [dq, H*T]
    v_block = p_ref[dq_pad:dq_pad + HT, 0:E]         # [H*T, E]

    # Scores for all heads/tokens: one tiny MXU matmul (scale already folded).
    s = jnp.dot(x_ref[...], w_score,
                preferred_element_type=jnp.float32)  # [N, H*T]

    # Per-head numerically-stable softmax over tokens.
    s3 = s.reshape(N, num_heads, tokens)             # [N, H, T]
    m = jnp.max(s3, axis=-1, keepdims=True)
    e = jnp.exp(s3 - m)
    denom = jnp.sum(e, axis=-1, keepdims=True)
    p = (e * pl.reciprocal(denom, approx=True)).reshape(N, HT)

    # Weighted sum via the block-diagonal V: second MXU matmul, result is
    # already lane-contiguous [N, E] -> single full-width store.
    out = jnp.dot(p, v_block, preferred_element_type=jnp.float32)
    o_ref[...] = out.astype(o_ref.dtype)


def _pack_params(embed, wq, wk, wv, num_heads: int):
    """One-time (init-time) fold of all parameters into a single VMEM slab."""
    T, dk = embed.shape                      # token_num, key_dim (= E // H)
    dq, E = wq.shape
    dh = E // num_heads
    HT = num_heads * T
    scale = 1.0 / (dk ** 0.5)

    keys = jnp.tanh(embed.astype(jnp.float32))           # [T, dk]
    K = keys @ wk.astype(jnp.float32)                    # [T, E]
    V = keys @ wv.astype(jnp.float32)                    # [T, E]
    K_heads = K.reshape(T, num_heads, dh)                # [T, H, dh]
    V_heads = V.reshape(T, num_heads, dh)                # [T, H, dh]
    Wq_heads = wq.astype(jnp.float32).reshape(dq, num_heads, dh)  # [dq, H, dh]

    # W_score[q, h*T + t] = scale * sum_d Wq[q, h, d] * K[t, h, d]
    w_score = (scale * jnp.einsum('qhd,thd->qht', Wq_heads, K_heads)
               ).reshape(dq, HT)                         # [dq, H*T]

    # V_block[h*T + t, g*dh + d] = V[t, h, d] * delta(h, g)
    eye_h = jnp.eye(num_heads, dtype=jnp.float32)
    v_block = jnp.einsum('thd,hg->htgd', V_heads, eye_h).reshape(HT, E)

    # Pack both into one slab (sublane-aligned offsets, common lane width).
    dq_pad = _round_up(dq, 8)
    w_max = max(HT, E)
    slab = jnp.zeros((dq_pad + HT, w_max), jnp.float32)
    slab = slab.at[:dq, :HT].set(w_score)
    slab = slab.at[dq_pad:dq_pad + HT, :E].set(v_block)
    return slab, dq, dq_pad, T, E


def make_stl_forward(embed, wq, wk, wv, *, num_heads: int):
    """Build the STL forward fn.  All parameter-dependent precompute happens
    here, once; the returned jitted callable closes over the packed slab."""
    slab, dq, dq_pad, tokens, E = _pack_params(embed, wq, wk, wv, num_heads)
    slab = jax.device_put(slab)
    HT = num_heads * tokens

    kernel = functools.partial(stl_kernel, num_heads=num_heads, tokens=tokens,
                               dq=dq, dq_pad=dq_pad)

    @jax.jit
    def forward(inputs):
        N = inputs.shape[0]
        cost = pl.CostEstimate(
            flops=2 * N * dq * HT + 2 * N * HT * E,
            transcendentals=N * HT,
            bytes_accessed=4 * (N * dq + slab.size + N * E),
        )
        # TODO(synk): for large batches add a 1-D "parallel" grid over N
        # (slab index_map -> (0, 0)) to use both v7x TensorCores.
        out = pl.pallas_call(
            kernel,
            out_shape=jax.ShapeDtypeStruct((N, E), jnp.float32),
            in_specs=[pl.BlockSpec(memory_space=pltpu.MemorySpace.VMEM),
                      pl.BlockSpec(memory_space=pltpu.MemorySpace.VMEM)],
            out_specs=pl.BlockSpec(memory_space=pltpu.MemorySpace.VMEM),
            cost_estimate=cost,
        )(inputs.astype(jnp.float32), slab)
        return out[:, None, :]                     # [N, 1, E] like PyTorch

    return forward


def stl_reference(inputs, embed, wq, wk, wv, *, num_heads: int):
    """Pure-JAX reference mirroring the PyTorch semantics exactly."""
    N = inputs.shape[0]
    dk = embed.shape[1]
    q = inputs[:, None, :]                                              # [N, 1, dq]
    keys = jnp.broadcast_to(jnp.tanh(embed)[None], (N,) + embed.shape)  # [N, T, dk]

    Q = q @ wq                                                # [N, 1, E]
    K = keys @ wk                                             # [N, T, E]
    V = keys @ wv                                             # [N, T, E]

    def split_heads(x):   # [N, S, E] -> [H, N, S, dh]
        return jnp.stack(jnp.split(x, num_heads, axis=2), axis=0)

    Qh, Kh, Vh = split_heads(Q), split_heads(K), split_heads(V)
    scores = (Qh @ jnp.swapaxes(Kh, 2, 3)) / (dk ** 0.5)      # [H, N, 1, T]
    scores = jax.nn.softmax(scores, axis=3)
    out = scores @ Vh                                         # [H, N, 1, dh]
    out = jnp.concatenate(jnp.split(out, num_heads, axis=0), axis=3)[0]  # [N, 1, E]
    return out


if __name__ == "__main__":
    # GSTParams: token_num=8, emb_dim=32, num_heads=4
    N, E, H, T = 2, 32, 4, 8
    dq = E // 2       # query_dim
    dk = E // H       # key_dim / token embedding dim

    key = jax.random.PRNGKey(0)
    k_in, k_emb, k_q, k_k, k_v = jax.random.split(key, 5)

    inputs = jax.random.normal(k_in, (N, dq), dtype=jnp.float32)
    embed = 0.5 * jax.random.normal(k_emb, (T, dk), dtype=jnp.float32)   # init.normal_(std=0.5)
    # Linear weights (bias=False), stored pre-transposed [in, out].
    wq = 0.1 * jax.random.normal(k_q, (dq, E), dtype=jnp.float32)
    wk = 0.1 * jax.random.normal(k_k, (dk, E), dtype=jnp.float32)
    wv = 0.1 * jax.random.normal(k_v, (dk, E), dtype=jnp.float32)

    # "Module init": parameter folds happen once, outside the per-call path.
    stl_forward = make_stl_forward(embed, wq, wk, wv, num_heads=H)

    out = stl_forward(inputs)
    out = jax.block_until_ready(out)

    ref = stl_reference(inputs, embed, wq, wk, wv, num_heads=H)
    assert out.shape == (N, 1, E), out.shape
    # Tolerance covers the EUP approximate reciprocal in the softmax
    # normalization (~2^-12 relative) and the re-associated parameter folds.
    assert jnp.allclose(out, ref, atol=1e-3, rtol=1e-3), float(jnp.max(jnp.abs(out - ref)))

    print("KERNEL_OK")
</pallas_src>

<mosaic_0001>
module attributes {stable_mosaic.version = 11 : i64} {
  func.func @stl_kernel(%arg0: memref<2x16xf32, #tpu.memory_space<vmem>>, %arg1: memref<48x32xf32, #tpu.memory_space<vmem>>, %arg2: memref<2x32xf32, #tpu.memory_space<vmem>>) attributes {dimension_semantics = [], scalar_prefetch = 0 : i64, scratch_operands = 0 : i64, tpu.core_type = #tpu.core_type<tc>} {
    %c0 = arith.constant 0 : index
    %c0_0 = arith.constant 0 : index
    %0 = vector.load %arg1[%c0, %c0_0] : memref<48x32xf32, #tpu.memory_space<vmem>>, vector<16x32xf32>
    %c16 = arith.constant 16 : index
    %c0_1 = arith.constant 0 : index
    %1 = vector.load %arg1[%c16, %c0_1] : memref<48x32xf32, #tpu.memory_space<vmem>>, vector<32x32xf32>
    %c0_2 = arith.constant 0 : index
    %c0_3 = arith.constant 0 : index
    %2 = vector.load %arg0[%c0_2, %c0_3] : memref<2x16xf32, #tpu.memory_space<vmem>>, vector<2x16xf32>
    %cst = arith.constant dense<0.000000e+00> : vector<2x32xf32>
    %3 = tpu.matmul %2, %0, %cst {dimension_numbers = #tpu.dot_dimension_numbers<[1], [0], [0], [1], [0, 0, 1, 1], [], []>} : vector<2x16xf32>, vector<16x32xf32>, vector<2x32xf32> -> vector<2x32xf32>
    %4 = vector.shape_cast %3 : vector<2x32xf32> to vector<2x4x8xf32>
    %cst_4 = arith.constant dense<0xFF800000> : vector<2x4xf32>
    %5 = vector.multi_reduction <maximumf>, %4, %cst_4 [2] : vector<2x4x8xf32> to vector<2x4xf32>
    %6 = vector.shape_cast %5 : vector<2x4xf32> to vector<2x4x1xf32>
    %7 = vector.broadcast %6 : vector<2x4x1xf32> to vector<2x4x8xf32>
    %8 = arith.subf %4, %7 : vector<2x4x8xf32>
    %9 = math.exp %8 : vector<2x4x8xf32>
    %cst_5 = arith.constant dense<0.000000e+00> : vector<2x4xf32>
    %10 = vector.multi_reduction <add>, %9, %cst_5 [2] : vector<2x4x8xf32> to vector<2x4xf32>
    %11 = vector.shape_cast %10 : vector<2x4xf32> to vector<2x4x1xf32>
    %12 = tpu.reciprocal %11 {approx = true} : vector<2x4x1xf32> -> vector<2x4x1xf32>
    %13 = vector.broadcast %12 : vector<2x4x1xf32> to vector<2x4x8xf32>
    %14 = arith.mulf %9, %13 : vector<2x4x8xf32>
    %15 = vector.shape_cast %14 : vector<2x4x8xf32> to vector<2x32xf32>
    %cst_6 = arith.constant dense<0.000000e+00> : vector<2x32xf32>
    %16 = tpu.matmul %15, %1, %cst_6 {dimension_numbers = #tpu.dot_dimension_numbers<[1], [0], [0], [1], [0, 0, 1, 1], [], []>} : vector<2x32xf32>, vector<32x32xf32>, vector<2x32xf32> -> vector<2x32xf32>
    %c0_7 = arith.constant 0 : index
    %c0_8 = arith.constant 0 : index
    %17 = vector.load %arg2[%c0_7, %c0_8] : memref<2x32xf32, #tpu.memory_space<vmem>>, vector<2x32xf32>
    tpu.vector_store %arg2[%c0_7, %c0_8], %16 {strides = array<i32>} : memref<2x32xf32, #tpu.memory_space<vmem>>, vector<2x32xf32>,
    return
  }
}

</mosaic_0001>

<llo_original>
// kernel: forward.1
$region0: #{forward.1}
  #allocation0 [shape = 'u32[]', space=smem, size = 0x4, offset = 0x4, fixed_abs, tag = 'smem constant byte address 0x4 - core index']
  #allocation1 [shape = 'u32[144,128]{1,0:T(1,128)}', space=vmem, size = 0x12000, scoped, tag = 'internal scratch']
  %s0 = inlined_call_operand.hbm [shape: f32[2,16], index: 0, kind: input, shape index: {}]
  %s1 = inlined_call_operand.hbm [shape: f32[48,32], index: 1, kind: input, shape index: {}]
  %s2 = inlined_call_operand.hbm [shape: f32[2,32], index: 2, kind: output, shape index: {}]
  %s3 = sld [smem:[#allocation0]]
  $region26: #{forward.1} parent=0
    _
  %s5 = ssub.s32 1, %s3
  %s6 = scalar_select 0, %s5, %s3
  $region1: #{forward.1} parent=0
    #allocation2 [shape = 'u8[1024]{0}', space=vmem, size = 0x400, scoped, tag = 'input window, operand 0, single buffered']
    #allocation3 [shape = 's32[1]{0}', space=sflag, size = 0x4, scoped, tag = 'scoped memory for forward.1']
    #allocation4 [shape = 's32[1]{0}', space=sflag, size = 0x4, scoped, tag = 'scoped memory for forward.1']
    #allocation5 [shape = 'u8[24576]{0}', space=vmem, size = 0x6000, scoped, tag = 'input window, operand 1, single buffered']
    #allocation6 [shape = 's32[1]{0}', space=sflag, size = 0x4, scoped, tag = 'scoped memory for forward.1']
    #allocation7 [shape = 'u8[1024]{0}', space=vmem, size = 0x400, scoped, tag = 'output window, operand 0, single buffered']
    %7 = vsyncpa [#allocation3], 0
    %8 = vsyncpa [#allocation6], 0
    %9 = vsyncpa [#allocation4], 0
    // Predicated region
    $region2: #{forward.1} parent=1 // pred_check
      _
    $region3: #{forward.1} parent=1 // pred_check_branch
      %11 = sbr.rel (0) target = $region5
    $region4: #{forward.1} parent=1 // pred_region
      %s13 = ssub.s32 32, 32
      %14 = vsyncadd [#allocation3], %s13
      %s16 = sshll.u32 [#allocation2], 4
      %s17 = int_to_ptr.vmem [resolvable:$true] %s16
      %19 = dma.hbm_to_vmem [thread:$0]  %s0, 32, %s17, [#allocation3]
    $region5: #{forward.1} parent=1 // pred_fallthru
      _
    // Predicated region
    $region6: #{forward.1} parent=1 // pred_check
      _
    $region7: #{forward.1} parent=1 // pred_check_branch
      %21 = sbr.rel (0) target = $region9
    $region8: #{forward.1} parent=1 // pred_region
      %s23 = ssub.s32 768, 768
      %24 = vsyncadd [#allocation6], %s23
      %s25 = sshll.u32 [#allocation5], 4
      %s26 = int_to_ptr.vmem [resolvable:$true] %s25
      %31 = dma.hbm_to_vmem [thread:$0]  %s1, 768, %s26, [#allocation6], 128, 128, 8
    $region9: #{forward.1} parent=1 // pred_fallthru
      _
    // Predicated region
    $region10: #{forward.1} parent=1 // pred_check
      _
    $region11: #{forward.1} parent=1 // pred_check_branch
      %33 = sbr.rel (0) target = $region13
    $region12: #{forward.1} parent=1 // pred_region
      %34 = dma.done [#allocation3], 32
    $region13: #{forward.1} parent=1 // pred_fallthru
      _
    // Predicated region
    $region14: #{forward.1} parent=1 // pred_check
      _
    $region15: #{forward.1} parent=1 // pred_check_branch
      %36 = sbr.rel (0) target = $region17
    $region16: #{forward.1} parent=1 // pred_region
      %37 = dma.done [#allocation6], 768
    $region17: #{forward.1} parent=1 // pred_fallthru
      _
    %v38 = vld [vmem:[#allocation5] sm:$0xff]
    %v39 = vld [vmem:[#allocation5 + $0x8] sm:$0xff]
    %v40 = vld [vmem:[#allocation5 + $0x10] sm:$0xff]
    %v41 = vld [vmem:[#allocation5 + $0x18] sm:$0xff]
    %v42 = vld [vmem:[#allocation5 + $0x20] sm:$0xff]
    %v43 = vld [vmem:[#allocation5 + $0x28] sm:$0xff]
    %v44 = vld [vmem:[#allocation2] sm:$0x3]
    %vm45 = vcmask 130048
    %v47 = vsel %vm45, %v44, 0
    %49 = vmatprep.subr.mxu0 0.0
    %50 = vmatpush1.msra.mxu0 %v38
    %51 = vmatprep.subr.mxu0 0.0
    %52 = vmatpush1.msra.mxu0 %v39
    %53 = vmatprep.subr.mxu0 0.0
    %54 = vmatpush1.msra.mxu0 0.0
    %55 = vmatprep.subr.mxu0 0.0
    %56 = vmatpush1.msra.mxu0 0.0
    %57 = vmatprep.subr.mxu0 0.0
    %58 = vmatpush1.msra.mxu0 0.0
    %59 = vmatprep.subr.mxu0 0.0
    %60 = vmatpush1.msra.mxu0 0.0
    %61 = vmatprep.subr.mxu0 0.0
    %62 = vmatpush1.msra.mxu0 0.0
    %63 = vmatprep.subr.mxu0 0.0
    %64 = vmatpush1.msra.mxu0 0.0
    %65 = vmatprep.subr.mxu0 0.0
    %66 = vmatpush1.msra.mxu0 0.0
    %67 = vmatprep.subr.mxu0 0.0
    %68 = vmatpush1.msra.mxu0 0.0
    %69 = vmatprep.subr.mxu0 0.0
    %70 = vmatpush1.msra.mxu0 0.0
    %71 = vmatprep.subr.mxu0 0.0
    %72 = vmatpush1.msra.mxu0 0.0
    %73 = vmatprep.subr.mxu0 0.0
    %74 = vmatpush1.msra.mxu0 0.0
    %75 = vmatprep.subr.mxu0 0.0
    %76 = vmatpush1.msra.mxu0 0.0
    %77 = vmatprep.subr.mxu0 0.0
    %78 = vmatpush1.msra.mxu0 0.0
    %79 = vmatprep.subr.mxu0 0.0
    %80 = vmatpush1.msra.mxu0 0.0
    %81 = vmatprep.subr.mxu0 0.0
    %82 = vmatpush1.msra.mxu0 0.0
    %83 = vmatprep.subr.mxu0 0.0
    %84 = vmatpush1.msra.mxu0 0.0
    %85 = vmatprep.subr.mxu0 0.0
    %86 = vmatpush1.msra.mxu0 0.0
    %87 = vmatprep.subr.mxu0 0.0
    %88 = vmatpush1.msra.mxu0 0.0
    %89 = vmatprep.subr.mxu0 0.0
    %90 = vmatpush1.msra.mxu0 0.0
    %91 = vmatprep.subr.mxu0 0.0
    %92 = vmatpush1.msra.mxu0 0.0
    %93 = vmatprep.subr.mxu0 0.0
    %94 = vmatpush1.msra.mxu0 0.0
    %95 = vmatprep.subr.mxu0 0.0
    %96 = vmatpush1.msra.mxu0 0.0
    %97 = vmatprep.subr.mxu0 0.0
    %98 = vmatpush1.msra.mxu0 0.0
    %99 = vmatprep.subr.mxu0 0.0
    %100 = vmatpush1.msra.mxu0 0.0
    %101 = vmatprep.subr.mxu0 0.0
    %102 = vmatpush1.msra.mxu0 0.0
    %103 = vmatprep.subr.mxu0 0.0
    %104 = vmatpush1.msra.mxu0 0.0
    %105 = vmatprep.subr.mxu0 0.0
    %106 = vmatpush1.msra.mxu0 0.0
    %107 = vmatprep.subr.mxu0 0.0
    %108 = vmatpush1.msra.mxu0 0.0
    %109 = vmatprep.subr.mxu0 0.0
    %110 = vmatpush1.msra.mxu0 0.0
    %111 = vmatprep.subr.mxu0 0.0
    %112 = vmatpush1.msra.mxu0 0.0
    %113 = vmatprep.mubr.f32.mxu0 0.0
    %114 = vmatmul.mubr.f32.gmra.mrb[0].mxu0 %v47
    %v115 = vpop.f32.mrb[0].mxu0
    %v116 = vadd.f32 0.0, %v115
    %v117 = vpop.f32.mrb[0].mxu0
    %118 = vdwg.mxu0
    %120 = vrot.lane.b32.xlu0 %v116, 120
    %v121 = vpop.permute.xlu0 %120
    %123 = vrot.lane.b32.xlu0 %v116, 112
    %v124 = vpop.permute.xlu0 %123
    %126 = vrot.lane.b32.xlu0 %v116, 104
    %v127 = vpop.permute.xlu0 %126
    %v129 = vcombine.low %v116, %v124
    %v131 = vunpack.c.l.s4 1983009808
    %v132 = vunpack.c.0.s8 %v131
    %v133 = vlaneseq
    %v134 = vshrl.u32 %v133, 7
    %v135 = vsub.s32 %v132, %v134
    %v136 = vrot.slane %v129, %v135
    %v137 = vcombine.low %v121, %v127
    %v139 = vunpack.c.l.s4 1983009808
    %v140 = vunpack.c.0.s8 %v139
    %v141 = vlaneseq
    %v142 = vshrl.u32 %v141, 7
    %v143 = vsub.s32 %v140, %v142
    %v144 = vrot.slane %v137, %v143
    %v145 = vcombine.low %v136, %v144
    %v147 = vunpack.c.l.s4 1934713408
    %v148 = vunpack.c.0.s8 %v147
    %v149 = vlaneseq
    %v150 = vshrl.u32 %v149, 7
    %v151 = vsub.s32 %v148, %v150
    %v152 = vrot.slane %v145, %v151
    %v153 = vcombine.high %v152, 0.0
    %vm154 = vcmask 60416
    %v155 = vsel %vm154, %v152, -inf
    %156 = vmax.xlane.f32.xlu0 %v155
    %v157 = vpop.xlane.xlu0 %156
    %v158 = vsel %vm154, %v153, -inf
    %159 = vmax.xlane.f32.xlu0 %v158
    %v160 = vpop.xlane.xlu0 %159
    %v161 = vsub.f32 %v152, %v157
    %v162 = vsub.f32 %v153, %v160
    %v163 = vmul.f32 %v161, 1.442695
    %v164 = vpow.pop %v163
    %v165 = vmul.f32 %v162, 1.442695
    %v166 = vpow.pop %v165
    %v167 = vsel %vm154, %v164, 0.0
    %168 = vadd.xlane.f32.xlu0 %v167
    %v169 = vpop.xlane.xlu0 %168
    %v170 = vsel %vm154, %v166, 0.0
    %171 = vadd.xlane.f32.xlu0 %v170
    %v172 = vpop.xlane.xlu0 %171
    %v173 = vrcp.pop %v169
    %v174 = vrcp.pop %v172
    %v175 = vmul.f32 %v164, %v173
    %v177 = vunpack.c.l.s4 1983009808
    %v178 = vunpack.c.0.s8 %v177
    %v179 = vlaneseq
    %v180 = vshrl.u32 %v179, 7
    %v181 = vsub.s32 %v178, %v180
    %v182 = vrot.slane %v175, %v181
    %v183 = vmul.f32 %v166, %v174
    %v185 = vunpack.c.l.s4 1983009808
    %v186 = vunpack.c.0.s8 %v185
    %v187 = vlaneseq
    %v188 = vshrl.u32 %v187, 7
    %v189 = vsub.s32 %v186, %v188
    %v190 = vrot.slane %v183, %v189
    %v191 = vcombine.low %v182, %v190
    %v192 = vcombine.high %v182, %v190
    %v194 = vunpack.c.l.s4 1934713408
    %v195 = vunpack.c.0.s8 %v194
    %v196 = vlaneseq
    %v197 = vshrl.u32 %v196, 7
    %v198 = vsub.s32 %v195, %v197
    %v199 = vrot.slane %v191, %v198
    %v201 = vunpack.c.l.s4 1934713408
    %v202 = vunpack.c.0.s8 %v201
    %v203 = vlaneseq
    %v204 = vshrl.u32 %v203, 7
    %v205 = vsub.s32 %v202, %v204
    %v206 = vrot.slane %v192, %v205
    %v207 = vcombine.high %v199, 0.0
    %v208 = vcombine.high %v206, 0.0
    %210 = vrot.lane.b32.xlu0 %v207, 8
    %v211 = vpop.permute.xlu0 %210
    %214 = vrot.lane.b32.xlu0 %v206, 16
    %v215 = vpop.permute.xlu0 %214
    %218 = vrot.lane.b32.xlu0 %v208, 24
    %v219 = vpop.permute.xlu0 %218
    %vm221 = vcmask 64512
    %v222 = vsel %vm221, %v199, %v211
    %v223 = vsel %vm45, %v222, %v215
    %vm224 = vcmask 195584
    %v225 = vsel %vm224, %v223, %v219
    %vm226 = vcmask 261120
    %v228 = vsel %vm226, %v225, 0
    %230 = vmatprep.subr.mxu0 0.0
    %231 = vmatpush1.msra.mxu0 %v40
    %232 = vmatprep.subr.mxu0 0.0
    %233 = vmatpush1.msra.mxu0 %v41
    %234 = vmatprep.subr.mxu0 0.0
    %235 = vmatpush1.msra.mxu0 %v42
    %236 = vmatprep.subr.mxu0 0.0
    %237 = vmatpush1.msra.mxu0 %v43
    %238 = vmatprep.subr.mxu0 0.0
    %239 = vmatpush1.msra.mxu0 0.0
    %240 = vmatprep.subr.mxu0 0.0
    %241 = vmatpush1.msra.mxu0 0.0
    %242 = vmatprep.subr.mxu0 0.0
    %243 = vmatpush1.msra.mxu0 0.0
    %244 = vmatprep.subr.mxu0 0.0
    %245 = vmatpush1.msra.mxu0 0.0
    %246 = vmatprep.subr.mxu0 0.0
    %247 = vmatpush1.msra.mxu0 0.0
    %248 = vmatprep.subr.mxu0 0.0
    %249 = vmatpush1.msra.mxu0 0.0
    %250 = vmatprep.subr.mxu0 0.0
    %251 = vmatpush1.msra.mxu0 0.0
    %252 = vmatprep.subr.mxu0 0.0
    %253 = vmatpush1.msra.mxu0 0.0
    %254 = vmatprep.subr.mxu0 0.0
    %255 = vmatpush1.msra.mxu0 0.0
    %256 = vmatprep.subr.mxu0 0.0
    %257 = vmatpush1.msra.mxu0 0.0
    %258 = vmatprep.subr.mxu0 0.0
    %259 = vmatpush1.msra.mxu0 0.0
    %260 = vmatprep.subr.mxu0 0.0
    %261 = vmatpush1.msra.mxu0 0.0
    %262 = vmatprep.subr.mxu0 0.0
    %263 = vmatpush1.msra.mxu0 0.0
    %264 = vmatprep.subr.mxu0 0.0
    %265 = vmatpush1.msra.mxu0 0.0
    %266 = vmatprep.subr.mxu0 0.0
    %267 = vmatpush1.msra.mxu0 0.0
    %268 = vmatprep.subr.mxu0 0.0
    %269 = vmatpush1.msra.mxu0 0.0
    %270 = vmatprep.subr.mxu0 0.0
    %271 = vmatpush1.msra.mxu0 0.0
    %272 = vmatprep.subr.mxu0 0.0
    %273 = vmatpush1.msra.mxu0 0.0
    %274 = vmatprep.subr.mxu0 0.0
    %275 = vmatpush1.msra.mxu0 0.0
    %276 = vmatprep.subr.mxu0 0.0
    %277 = vmatpush1.msra.mxu0 0.0
    %278 = vmatprep.subr.mxu0 0.0
    %279 = vmatpush1.msra.mxu0 0.0
    %280 = vmatprep.subr.mxu0 0.0
    %281 = vmatpush1.msra.mxu0 0.0
    %282 = vmatprep.subr.mxu0 0.0
    %283 = vmatpush1.msra.mxu0 0.0
    %284 = vmatprep.subr.mxu0 0.0
    %285 = vmatpush1.msra.mxu0 0.0
    %286 = vmatprep.subr.mxu0 0.0
    %287 = vmatpush1.msra.mxu0 0.0
    %288 = vmatprep.subr.mxu0 0.0
    %289 = vmatpush1.msra.mxu0 0.0
    %290 = vmatprep.subr.mxu0 0.0
    %291 = vmatpush1.msra.mxu0 0.0
    %292 = vmatprep.subr.mxu0 0.0
    %293 = vmatpush1.msra.mxu0 0.0
    %294 = vmatprep.mubr.f32.mxu0 0.0
    %295 = vmatmul.mubr.f32.gmra.mrb[0].mxu0 %v228
    %v296 = vpop.f32.mrb[0].mxu0
    %v297 = vadd.f32 0.0, %v296
    %v298 = vpop.f32.mrb[0].mxu0
    %299 = vdwg.mxu0
    %vm300 = vcmask 254976
    %301 = vst.msk [vmem:[#allocation7] sm:$0x3] %vm300, %v297
    // Predicated region
    $region18: #{forward.1} parent=1 // pred_check
      _
    $region19: #{forward.1} parent=1 // pred_check_branch
      %303 = sbr.rel (0) target = $region21
    $region20: #{forward.1} parent=1 // pred_region
      %s305 = ssub.s32 32, 32
      %306 = vsyncadd [#allocation4], %s305
      %s308 = sshll.u32 [#allocation7], 4
      %s309 = int_to_ptr.vmem [resolvable:$true] %s308
      %311 = dma.vmem_to_hbm [thread:$0]  %s309, 32, %s2, [#allocation4]
    $region21: #{forward.1} parent=1 // pred_fallthru
      _
    // Predicated region
    $region22: #{forward.1} parent=1 // pred_check
      _
    $region23: #{forward.1} parent=1 // pred_check_branch
      %313 = sbr.rel (0) target = $region25
    $region24: #{forward.1} parent=1 // pred_region
      %314 = dma.done [#allocation4], 32
    $region25: #{forward.1} parent=1 // pred_fallthru
      _
    %315 = vsyncpa [#allocation3], 1
    %316 = vsyncpa [#allocation6], 1
    %317 = vsyncpa [#allocation4], 1

</llo_original>
